<compile_context>
chip_gen: v5e
topology: v5e:2x2
jax: 0.10.0
libtpu: 0.0.40
codegen_flags: <defaults>
</compile_context>

<pallas_src>
import math
import functools

import jax
import jax.numpy as jnp
from jax.experimental import pallas as pl
from jax.experimental.pallas import tpu as pltpu

_LANE = 128
_MIB = 1024 * 1024


# --------------------------------------------------------------------------
# shared in-kernel helper: zero-padded 1-D conv over the LAST axis + sigmoid
# --------------------------------------------------------------------------
def _conv1d_sigmoid(y, w_ref, k):
    """y: (..., C) float32 pooled means, channels on the lane axis.
    w_ref: (k,) float32 in SMEM.  Returns sigmoid(conv1d(y)) in float32."""
    pad = (k - 1) // 2
    c = y.shape[-1]
    if pad:
        zeros = jnp.zeros(y.shape[:-1] + (pad,), jnp.float32)
        y_pad = jnp.concatenate([zeros, y, zeros], axis=-1)
    else:
        y_pad = y
    acc = jnp.zeros_like(y)
    for j in range(k):                       # k is tiny (3/5/7): unrolled
        acc = acc + w_ref[j] * y_pad[..., j:j + c]
    return jax.nn.sigmoid(acc)               # EUP


# --------------------------------------------------------------------------
# path 1: fused single pass, whole-HW blocks of tb batch elements
# --------------------------------------------------------------------------
def _eca_fused_kernel(w_ref, x_ref, o_ref, *, k, inv_hw):
    """w_ref: (k,) f32 SMEM.  x_ref/o_ref: (tb, C, HW) in the input dtype."""
    # 1) global average pool over HW, accumulated in f32 (bf16-safe).
    y = jnp.sum(x_ref[...], axis=-1, dtype=jnp.float32) * inv_hw    # (tb, C)
    # 2-3) channel conv (C dense on lanes -> cheap even for large C) + gate.
    gate = _conv1d_sigmoid(y, w_ref, k)                              # (tb, C)
    # 4) broadcast multiply back onto x; re-read x_ref to keep vreg pressure
    #    flat; gate cast to the streaming dtype so the multiply stays narrow.
    o_ref[...] = x_ref[...] * gate[:, :, None].astype(o_ref.dtype)


# --------------------------------------------------------------------------
# path 2a: pooling + gate kernel (HW reduction axis last, "arbitrary")
# --------------------------------------------------------------------------
def _eca_gate_kernel(w_ref, x_ref, gate_ref, *, k, hw, thw, inv_hw, mask_tail):
    """x_ref: (1, C, thw).  gate_ref: (1, 1, C) f32, resident across the HW
    axis (same out block index for every h) -> used as the accumulator."""
    h = pl.program_id(1)

    @pl.when(h == 0)
    def _():
        gate_ref[...] = jnp.zeros_like(gate_ref)

    x = x_ref[...]
    if mask_tail:  # only traced when hw % thw != 0: zero the OOB tail lanes
        lane = jax.lax.broadcasted_iota(jnp.int32, x.shape, 2)
        x = jnp.where(h * thw + lane < hw, x, jnp.zeros_like(x))
    part = jnp.sum(x, axis=-1, dtype=jnp.float32)                    # (1, C)
    gate_ref[...] += part[:, None, :]

    @pl.when(h == pl.num_programs(1) - 1)
    def _():
        y = gate_ref[...] * inv_hw                                   # (1,1,C)
        gate_ref[...] = _conv1d_sigmoid(y, w_ref, k)


# --------------------------------------------------------------------------
# path 2b: scale kernel (reads the per-(batch, channel) gate, rescales x)
# --------------------------------------------------------------------------
def _eca_scale_kernel(gate_ref, x_ref, o_ref):
    """gate_ref: (1, 1, C) f32.  x_ref/o_ref: (1, C, thw) input dtype."""
    g = jnp.transpose(gate_ref[...], (0, 2, 1)).astype(o_ref.dtype)  # (1,C,1)
    o_ref[...] = x_ref[...] * g


# --------------------------------------------------------------------------
# wrapper
# --------------------------------------------------------------------------
def _device_caps():
    """(vmem_budget_bytes, target_block_bytes, num_tensorcores)."""
    try:
        kind = jax.devices()[0].device_kind.lower().replace(" ", "")
    except Exception:
        kind = ""
    is_v7 = ("v7" in kind) or ("tpu7" in kind)
    big_vmem = (("v5" in kind) or ("v6" in kind)) and not is_v7  # 128 MiB VMEM
    vmem_budget = (100 if big_vmem else 48) * _MIB   # 48 MiB is v7x-safe
    target_block = (8 if big_vmem else 4) * _MIB
    num_cores = 2 if is_v7 else 1
    return vmem_budget, target_block, num_cores


def eca_kernel_size(channels: int, gamma: int = 2, b: int = 1) -> int:
    t = int(abs((math.log(channels, 2) + b) / gamma))
    return t if t % 2 else t + 1


def eca_block(x: jax.Array, conv_w: jax.Array, *, hw_block=None,
              force_two_pass: bool = False) -> jax.Array:
    """x: (B, C, H, W) any float dtype.  conv_w: (1, 1, k) (PyTorch Conv1d)."""
    B, C, H, W = x.shape
    k = int(conv_w.shape[-1])
    hw = H * W
    dsize = x.dtype.itemsize
    inv_hw = 1.0 / float(hw)
    vmem_budget, target_block, num_cores = _device_caps()

    x_flat = x.reshape(B, C, hw)                 # free reshape; no pad, no cast
    w1d = conv_w.reshape(k).astype(jnp.float32)  # k scalars -> SMEM

    bytes_per_batch = C * hw * dsize
    use_two_pass = force_two_pass or (5 * bytes_per_batch > vmem_budget)

    if not use_two_pass:
        # ---------------- fused single pass ----------------
        tb = max(1, min(B, target_block // max(1, bytes_per_batch)))
        steps = -(-B // tb)                      # cdiv: partial tail allowed
        if num_cores > 1 and steps > 1 and steps % 2:
            # even grid so both v7x TensorCores stay busy
            for cand in range(tb, 0, -1):
                if (-(-B // cand)) % 2 == 0:
                    tb, steps = cand, -(-B // cand)
                    break
        block_bytes = tb * bytes_per_batch
        vmem_limit = int(min(vmem_budget, max(32 * _MIB, 5 * block_bytes)))

        cost = pl.CostEstimate(
            flops=2 * B * C * hw + 2 * B * C * k,
            transcendentals=B * C,
            bytes_accessed=2 * B * C * hw * dsize + k * 4)

        out_flat = pl.pallas_call(
            functools.partial(_eca_fused_kernel, k=k, inv_hw=inv_hw),
            out_shape=jax.ShapeDtypeStruct((B, C, hw), x.dtype),
            grid_spec=pl.GridSpec(
                grid=(steps,),
                in_specs=[
                    pl.BlockSpec(memory_space=pltpu.MemorySpace.SMEM),
                    pl.BlockSpec((tb, C, hw), lambda b: (b, 0, 0)),
                ],
                out_specs=pl.BlockSpec((tb, C, hw), lambda b: (b, 0, 0)),
            ),
            compiler_params=pltpu.CompilerParams(
                dimension_semantics=("parallel",),
                vmem_limit_bytes=vmem_limit,
            ),
            cost_estimate=cost,
        )(w1d, x_flat)
        return out_flat.reshape(B, C, H, W)

    # ---------------- two-pass HW split (huge per-batch feature maps) -------
    if hw_block is None:
        hw_block = max(_LANE,
                       (target_block // 2 // max(1, C * dsize)) // _LANE * _LANE)
    thw = min(hw, int(hw_block))
    if thw < hw:
        thw = max(_LANE, thw // _LANE * _LANE)   # lane-aligned chunks
    nh = -(-hw // thw)
    mask_tail = (hw % thw) != 0

    # pass 1: pooled mean -> channel conv -> sigmoid gate, per batch element
    gate = pl.pallas_call(
        functools.partial(_eca_gate_kernel, k=k, hw=hw, thw=thw,
                          inv_hw=inv_hw, mask_tail=mask_tail),
        out_shape=jax.ShapeDtypeStruct((B, 1, C), jnp.float32),
        grid_spec=pl.GridSpec(
            grid=(B, nh),
            in_specs=[
                pl.BlockSpec(memory_space=pltpu.MemorySpace.SMEM),
                pl.BlockSpec((1, C, thw), lambda b, h: (b, 0, h)),
            ],
            out_specs=pl.BlockSpec((1, 1, C), lambda b, h: (b, 0, 0)),
        ),
        compiler_params=pltpu.CompilerParams(
            dimension_semantics=("parallel", "arbitrary"),
            vmem_limit_bytes=int(min(vmem_budget,
                                     max(32 * _MIB, 4 * C * thw * dsize))),
        ),
        cost_estimate=pl.CostEstimate(
            flops=B * C * hw + 2 * B * C * k,
            transcendentals=B * C,
            bytes_accessed=B * C * hw * dsize + B * C * 4 + k * 4),
    )(w1d, x_flat)

    # pass 2: stream x again, broadcast-multiply by the gate
    out_flat = pl.pallas_call(
        _eca_scale_kernel,
        out_shape=jax.ShapeDtypeStruct((B, C, hw), x.dtype),
        grid_spec=pl.GridSpec(
            grid=(B, nh),
            in_specs=[
                pl.BlockSpec((1, 1, C), lambda b, h: (b, 0, 0)),
                pl.BlockSpec((1, C, thw), lambda b, h: (b, 0, h)),
            ],
            out_specs=pl.BlockSpec((1, C, thw), lambda b, h: (b, 0, h)),
        ),
        compiler_params=pltpu.CompilerParams(
            dimension_semantics=("parallel", "parallel"),
            vmem_limit_bytes=int(min(vmem_budget,
                                     max(32 * _MIB, 5 * C * thw * dsize))),
        ),
        cost_estimate=pl.CostEstimate(
            flops=B * C * hw, transcendentals=0,
            bytes_accessed=2 * B * C * hw * dsize + B * C * 4),
    )(gate, x_flat)
    return out_flat.reshape(B, C, H, W)


# --------------------------------------------------------------------------
# pure-JAX reference matching the PyTorch forward exactly
# --------------------------------------------------------------------------
def eca_reference(x: jax.Array, conv_w: jax.Array) -> jax.Array:
    B, C, H, W = x.shape
    k = conv_w.shape[-1]
    pad = (k - 1) // 2
    y = jnp.mean(x, axis=(2, 3))                       # (B, C)
    y_pad = jnp.pad(y, ((0, 0), (pad, pad)))           # (B, C + k - 1)
    w = conv_w.reshape(k)
    conv = jnp.stack(
        [jnp.sum(y_pad[:, c:c + k] * w, axis=-1) for c in range(C)], axis=-1)
    gate = jax.nn.sigmoid(conv)[:, :, None, None]
    return x * gate


if __name__ == "__main__":
    # channels=8 -> t = int(|log2(8)+1| / 2) = 2 (even) -> k = 3
    B, C, H, W = 2, 8, 16, 16
    k = eca_kernel_size(C)  # = 3

    key = jax.random.PRNGKey(0)
    kx, kw = jax.random.split(key)
    x = jax.random.normal(kx, (B, C, H, W), dtype=jnp.float32)
    conv_w = jax.random.normal(kw, (1, 1, k), dtype=jnp.float32) * 0.5

    ref = jax.block_until_ready(eca_reference(x, conv_w))

    # 1) fused single-pass path (default for normal feature-map sizes)
    out = jax.block_until_ready(eca_block(x, conv_w))
    assert out.shape == x.shape and out.dtype == x.dtype
    assert jnp.allclose(out, ref, atol=1e-4, rtol=1e-4), (
        f"fused path max abs diff {float(jnp.max(jnp.abs(out - ref)))}")

    # 2) two-pass HW-split path (v7x large-feature-map fallback), forced here
    out2 = jax.block_until_ready(
        eca_block(x, conv_w, force_two_pass=True, hw_block=128))
    assert jnp.allclose(out2, ref, atol=1e-4, rtol=1e-4), (
        f"two-pass path max abs diff {float(jnp.max(jnp.abs(out2 - ref)))}")

    # 3) bf16 stays bf16 end-to-end (no wrapper casts; pool accumulates in f32)
    xb = x.astype(jnp.bfloat16)
    outb = jax.block_until_ready(eca_block(xb, conv_w))
    assert outb.dtype == jnp.bfloat16
    refb = eca_reference(xb.astype(jnp.float32), conv_w)
    assert jnp.allclose(outb.astype(jnp.float32), refb, atol=5e-2, rtol=5e-2)

    print("KERNEL_OK")
</pallas_src>

<mosaic_0001>
module attributes {stable_mosaic.version = 11 : i64} {
  func.func @_eca_fused_kernel(%arg0: i32, %arg1: memref<3xf32, #tpu.memory_space<smem>>, %arg2: memref<2x8x256xf32, #tpu.memory_space<vmem>>, %arg3: memref<2x8x256xf32, #tpu.memory_space<vmem>>) attributes {dimension_semantics = [#tpu.dimension_semantics<parallel>], iteration_bounds = array<i64: 1>, scalar_prefetch = 0 : i64, scratch_operands = 0 : i64, tpu.core_type = #tpu.core_type<tc>, window_params = [{transform_indices = @transform_0, window_bounds = array<i64: 3>}, {transform_indices = @transform_1, window_bounds = array<i64: 2, 8, 256>}, {transform_indices = @transform_2, window_bounds = array<i64: 2, 8, 256>}]} {
    %c0 = arith.constant 0 : index
    %c0_0 = arith.constant 0 : index
    %c0_1 = arith.constant 0 : index
    %0 = vector.load %arg2[%c0, %c0_0, %c0_1] : memref<2x8x256xf32, #tpu.memory_space<vmem>>, vector<2x8x256xf32>
    %cst = arith.constant dense<0.000000e+00> : vector<2x8xf32>
    %1 = vector.multi_reduction <add>, %0, %cst [2] : vector<2x8x256xf32> to vector<2x8xf32>
    %cst_2 = arith.constant 3.906250e-03 : f32
    %2 = vector.broadcast %cst_2 : f32 to vector<2x8xf32>
    %3 = arith.mulf %1, %2 : vector<2x8xf32>
    %cst_3 = arith.constant 0.000000e+00 : f32
    %4 = vector.broadcast %cst_3 : f32 to vector<2x1xf32>
    %5 = tpu.concatenate %4, %3, %4 in 1 : vector<2x1xf32>, vector<2x8xf32>, vector<2x1xf32> -> vector<2x10xf32>
    %cst_4 = arith.constant 0.000000e+00 : f32
    %6 = vector.broadcast %cst_4 : f32 to vector<2x8xf32>
    %c0_5 = arith.constant 0 : index
    %7 = memref.load %arg1[%c0_5] : memref<3xf32, #tpu.memory_space<smem>>
    %8 = vector.extract_strided_slice %5 {offsets = [0, 0], sizes = [2, 8], strides = [1, 1]} : vector<2x10xf32> to vector<2x8xf32>
    %9 = vector.broadcast %7 : f32 to vector<2x8xf32>
    %10 = arith.mulf %9, %8 : vector<2x8xf32>
    %11 = arith.addf %6, %10 : vector<2x8xf32>
    %c1 = arith.constant 1 : index
    %12 = memref.load %arg1[%c1] : memref<3xf32, #tpu.memory_space<smem>>
    %13 = vector.extract_strided_slice %5 {offsets = [0, 1], sizes = [2, 8], strides = [1, 1]} : vector<2x10xf32> to vector<2x8xf32>
    %14 = vector.broadcast %12 : f32 to vector<2x8xf32>
    %15 = arith.mulf %14, %13 : vector<2x8xf32>
    %16 = arith.addf %11, %15 : vector<2x8xf32>
    %c2 = arith.constant 2 : index
    %17 = memref.load %arg1[%c2] : memref<3xf32, #tpu.memory_space<smem>>
    %18 = vector.extract_strided_slice %5 {offsets = [0, 2], sizes = [2, 8], strides = [1, 1]} : vector<2x10xf32> to vector<2x8xf32>
    %19 = vector.broadcast %17 : f32 to vector<2x8xf32>
    %20 = arith.mulf %19, %18 : vector<2x8xf32>
    %21 = arith.addf %16, %20 : vector<2x8xf32>
    %22 = arith.negf %21 : vector<2x8xf32>
    %23 = math.exp %22 : vector<2x8xf32>
    %cst_6 = arith.constant 1.000000e+00 : f32
    %24 = vector.broadcast %cst_6 : f32 to vector<2x8xf32>
    %25 = arith.addf %24, %23 : vector<2x8xf32>
    %26 = arith.divf %24, %25 : vector<2x8xf32>
    %c0_7 = arith.constant 0 : index
    %c0_8 = arith.constant 0 : index
    %c0_9 = arith.constant 0 : index
    %27 = vector.load %arg2[%c0_7, %c0_8, %c0_9] : memref<2x8x256xf32, #tpu.memory_space<vmem>>, vector<2x8x256xf32>
    %28 = vector.shape_cast %26 : vector<2x8xf32> to vector<2x8x1xf32>
    %29 = vector.broadcast %28 : vector<2x8x1xf32> to vector<2x8x256xf32>
    %30 = arith.mulf %27, %29 : vector<2x8x256xf32>
    %c0_10 = arith.constant 0 : index
    %c0_11 = arith.constant 0 : index
    %c0_12 = arith.constant 0 : index
    %31 = vector.load %arg3[%c0_10, %c0_11, %c0_12] : memref<2x8x256xf32, #tpu.memory_space<vmem>>, vector<2x8x256xf32>
    tpu.vector_store %arg3[%c0_10, %c0_11, %c0_12], %30 {strides = array<i32>} : memref<2x8x256xf32, #tpu.memory_space<vmem>>, vector<2x8x256xf32>,
    return
  }
  func.func @transform_0(%arg0: i32) -> i32 {
    %c0_i32 = arith.constant 0 : i32
    %c0_i32_0 = arith.constant 0 : i32
    return %c0_i32 : i32
  }
  func.func @transform_1(%arg0: i32) -> (i32, i32, i32) {
    %c0_i32 = arith.constant 0 : i32
    %c0_i32_0 = arith.constant 0 : i32
    %c0_i32_1 = arith.constant 0 : i32
    return %arg0, %c0_i32, %c0_i32_0 : i32, i32, i32
  }
  func.func @transform_2(%arg0: i32) -> (i32, i32, i32) {
    %c0_i32 = arith.constant 0 : i32
    %c0_i32_0 = arith.constant 0 : i32
    %c0_i32_1 = arith.constant 0 : i32
    return %arg0, %c0_i32, %c0_i32_0 : i32, i32, i32
  }
}

</mosaic_0001>

<llo_original>
// kernel: tpu_custom_call.1
$region0: #{tpu_custom_call.1}
  #allocation0 [shape = 'u32[]', space=smem, size = 0x4, offset = 0x4, fixed_abs, tag = 'smem constant byte address 0x4 - core index']
  #allocation1 [shape = 'u32[72,128]{1,0:T(1,128)}', space=vmem, size = 0x9000, scoped, tag = 'internal scratch']
  %s0 = inlined_call_operand.hbm [shape: f32[3], index: 0, kind: input, shape index: {}]
  %s1 = inlined_call_operand.hbm [shape: f32[2,8,256], index: 1, kind: input, shape index: {}]
  %s2 = inlined_call_operand.hbm [shape: f32[2,8,256], index: 2, kind: output, shape index: {}]
  %s3 = sld [smem:[#allocation0]]
  $region26: #{tpu_custom_call.1} parent=0
    _
  %s5 = ssub.s32 1, %s3
  %s6 = scalar_select 0, %s5, %s3
  $region1: #{tpu_custom_call.1} parent=0
    #allocation2 [shape = 'u8[512]{0}', space=smem, size = 0x200, scoped, tag = 'input window, operand 0, single buffered']
    #allocation3 [shape = 's32[1]{0}', space=sflag, size = 0x4, scoped, tag = 'scoped memory for tpu_custom_call.1']
    #allocation4 [shape = 's32[1]{0}', space=sflag, size = 0x4, scoped, tag = 'scoped memory for tpu_custom_call.1']
    #allocation5 [shape = 's32[1]{0}', space=sflag, size = 0x4, scoped, tag = 'scoped memory for tpu_custom_call.1']
    #allocation6 [shape = 'u8[16384]{0}', space=vmem, size = 0x4000, scoped, tag = 'input window, operand 1, single buffered']
    #allocation7 [shape = 'u8[16384]{0}', space=vmem, size = 0x4000, scoped, tag = 'output window, operand 0, single buffered']
    %7 = vsyncpa [#allocation5], 0
    %8 = vsyncpa [#allocation3], 0
    %9 = vsyncpa [#allocation4], 0
    // Predicated region
    $region2: #{tpu_custom_call.1} parent=1 // pred_check
      _
    $region3: #{tpu_custom_call.1} parent=1 // pred_check_branch
      %11 = sbr.rel (0) target = $region5
    $region4: #{tpu_custom_call.1} parent=1 // pred_region
      %13 = vsyncadd [#allocation5], 0
      %s15 = sshll.u32 %s0, 4
      %s16 = int_to_ptr.hbm [resolvable:$true] %s15
      %18 = dma.hbm_to_smem %s16, 16, [#allocation2], [#allocation5]
    $region5: #{tpu_custom_call.1} parent=1 // pred_fallthru
      _
    // Predicated region
    $region6: #{tpu_custom_call.1} parent=1 // pred_check
      _
    $region7: #{tpu_custom_call.1} parent=1 // pred_check_branch
      %20 = sbr.rel (0) target = $region9
    $region8: #{tpu_custom_call.1} parent=1 // pred_region
      %22 = vsyncadd [#allocation3], 0
      %s23 = sshll.u32 %s1, 4
      %s24 = int_to_ptr.hbm [resolvable:$true] %s23
      %s25 = sshll.u32 [#allocation6], 4
      %s26 = int_to_ptr.vmem [resolvable:$true] %s25
      %31 = dma.hbm_to_vmem [thread:$0]  %s24, 512, %s26, [#allocation3], 256, 256, 16
    $region9: #{tpu_custom_call.1} parent=1 // pred_fallthru
      _
    // Predicated region
    $region10: #{tpu_custom_call.1} parent=1 // pred_check
      _
    $region11: #{tpu_custom_call.1} parent=1 // pred_check_branch
      %33 = sbr.rel (0) target = $region13
    $region12: #{tpu_custom_call.1} parent=1 // pred_region
      %35 = dma.done [#allocation5], 16
    $region13: #{tpu_custom_call.1} parent=1 // pred_fallthru
      _
    // Predicated region
    $region14: #{tpu_custom_call.1} parent=1 // pred_check
      _
    $region15: #{tpu_custom_call.1} parent=1 // pred_check_branch
      %37 = sbr.rel (0) target = $region17
    $region16: #{tpu_custom_call.1} parent=1 // pred_region
      %39 = dma.done [#allocation3], 512
    $region17: #{tpu_custom_call.1} parent=1 // pred_fallthru
      _
    %40 = sfence
    %v41 = vld [vmem:[#allocation6] sm:$0xff]
    %v42 = vld [vmem:[#allocation6 + $0x8] sm:$0xff]
    %v43 = vld [vmem:[#allocation6 + $0x10] sm:$0xff]
    %v44 = vld [vmem:[#allocation6 + $0x18] sm:$0xff]
    %v45 = vadd.f32 %v41, %v42
    %46 = vadd.xlane.f32.xlu0 %v45
    %v47 = vpop.xlane.xlu0 %46
    %v48 = vadd.f32 %v43, %v44
    %49 = vadd.xlane.f32.xlu0 %v48
    %v50 = vpop.xlane.xlu0 %49
    %v51 = vmul.f32 %v47, 0.00390625
    %v52 = vmul.f32 %v50, 0.00390625
    %v55 = vlaneseq
    %v56 = vand.u32 %v55, 127
    %v57 = vadd.s32 %v56, 4294967295
    %v58 = vperm.slane %v51, %v57
    %v59 = vperm.slane %v52, %v57
    %vm60 = vcmask 1041409
    %v61 = vsel %vm60, %v59, %v58
    %vm63 = vcmask 7168
    %v64 = vsel %vm63, 0.0, %v61
    %vm65 = vcmask 72704
    %v66 = vsel %vm65, %v64, 0.0
    %s67 = sld [smem:[#allocation2]]
    %v68 = vstv %s67
    %v69 = vmul.f32 %v68, %v66
    %v70 = vadd.f32 %v69, 0.0
    %s71 = sld [smem:[#allocation2 + $0x1]]
    %v72 = vstv %s71
    %v73 = vmul.f32 %v72, %v66
    %75 = vrot.lane.b32.xlu0 %v73, 127
    %v76 = vpop.permute.xlu0 %75
    %v78 = vadd.f32 %v70, %v76
    %s79 = sld [smem:[#allocation2 + $0x2]]
    %v80 = vstv %s79
    %v81 = vmul.f32 %v80, %v66
    %83 = vrot.lane.b32.xlu0 %v81, 126
    %v84 = vpop.permute.xlu0 %83
    %v86 = vadd.f32 %v78, %v84
    %v87 = vxor.u32 %v86, 2147483648
    %v88 = vmul.f32 %v87, 1.442695
    %v89 = vpow.pop %v88
    %v90 = vadd.f32 %v89, 1.0
    %v91 = vrcp.pop %v90
    %v92 = vmul.f32 %v90, %v91
    %v93 = vsub.f32 1.0, %v92
    %v94 = vmul.f32 %v91, %v93
    %v95 = vadd.f32 %v91, %v94
    %vm96 = vweird.f32 %v90
    %vm97 = vweird.f32 %v91
    %vm98 = vmor %vm96, %vm97
    %v99 = vsel %vm98, %v91, %v95
    %v100 = vand.u32 2147483647, %v90
    %vm101 = vcmp.eq.f32.partialorder %v100, 8.507059e+37
    %v102 = vand.u32 %v90, 2147483648
    %v103 = vor.u32 1.1754944e-38, %v102
    %v104 = vsel %vm101, %v103, %v99
    %v105 = vmul.f32 1.0, %v104
    %v106 = vperm.slane %v105, 0
    %v107 = vlaneseq
    %v108 = vshrl.u32 %v107, 7
    %110 = vset.pattern.permute.xlu0 %v108
    %111 = vperm.xlu0 %110, %v106
    %v112 = vpop.permute.xlu0 %111
    %v113 = vperm.slane %v105, 1
    %v114 = vlaneseq
    %v115 = vshrl.u32 %v114, 7
    %117 = vset.pattern.permute.xlu0 %v115
    %118 = vperm.xlu0 %117, %v113
    %v119 = vpop.permute.xlu0 %118
    %v120 = vmul.f32 %v41, %v112
    %v121 = vmul.f32 %v42, %v112
    %v122 = vmul.f32 %v43, %v119
    %v123 = vmul.f32 %v44, %v119
    %124 = vst [vmem:[#allocation7] sm:$0xff] %v120
    %125 = vst [vmem:[#allocation7 + $0x8] sm:$0xff] %v121
    %126 = vst [vmem:[#allocation7 + $0x10] sm:$0xff] %v122
    %127 = vst [vmem:[#allocation7 + $0x18] sm:$0xff] %v123
    // Predicated region
    $region18: #{tpu_custom_call.1} parent=1 // pred_check
      _
    $region19: #{tpu_custom_call.1} parent=1 // pred_check_branch
      %129 = sbr.rel (0) target = $region21
    $region20: #{tpu_custom_call.1} parent=1 // pred_region
      %131 = vsyncadd [#allocation4], 0
      %s132 = sshll.u32 [#allocation7], 4
      %s133 = int_to_ptr.vmem [resolvable:$true] %s132
      %s134 = sshll.u32 %s2, 4
      %s135 = int_to_ptr.hbm [resolvable:$true] %s134
      %140 = dma.vmem_to_hbm [thread:$0]  %s133, 512, %s135, [#allocation4], 256, 256, 16
    $region21: #{tpu_custom_call.1} parent=1 // pred_fallthru
      _
    // Predicated region
    $region22: #{tpu_custom_call.1} parent=1 // pred_check
      _
    $region23: #{tpu_custom_call.1} parent=1 // pred_check_branch
      %142 = sbr.rel (0) target = $region25
    $region24: #{tpu_custom_call.1} parent=1 // pred_region
      %144 = dma.done [#allocation4], 512
    $region25: #{tpu_custom_call.1} parent=1 // pred_fallthru
      _
    %145 = vsyncpa [#allocation3], 1
    %146 = vsyncpa [#allocation4], 1
    %147 = vsyncpa [#allocation5], 1

</llo_original>
